<compile_context>
chip_gen: v6e
topology: v6e:2x2x1
jax: 0.10.0
libtpu: 0.0.40
codegen_flags: <defaults>
</compile_context>

<pallas_src>
import functools
import math

import jax
import jax.numpy as jnp
from jax.experimental import pallas as pl
from jax.experimental.pallas import tpu as pltpu


def _make_pe(max_len, d_model, dtype=jnp.float32):
    """Deterministic sinusoidal table, identical to extend_pe() in the module."""
    position = jnp.arange(max_len, dtype=jnp.float32)[:, None]                  # (L, 1)
    div_term = jnp.exp(
        jnp.arange(0, d_model, 2, dtype=jnp.float32) * -(math.log(10000.0) / d_model)
    )                                                                            # (D/2,)
    pe = jnp.zeros((max_len, d_model), dtype=jnp.float32)
    pe = pe.at[:, 0::2].set(jnp.sin(position * div_term))
    pe = pe.at[:, 1::2].set(jnp.cos(position * div_term))
    return pe[None, :, :].astype(dtype)                                          # (1, L, D)


# ------------------------------- kernels ------------------------------------


def _posemb_eval_kernel(x_ref, pe_ref, o_ref, *, xscale):
    # VPU elementwise: scale + add PE (pe block is (1, tT, D), broadcasts over B).
    y = x_ref[...].astype(jnp.float32) * xscale + pe_ref[...].astype(jnp.float32)
    o_ref[...] = y.astype(o_ref.dtype)


def _posemb_train_kernel(x_ref, pe_ref, bits_ref, o_ref, *, xscale, p_drop):
    y = x_ref[...].astype(jnp.float32) * xscale + pe_ref[...].astype(jnp.float32)

    if p_drop >= 1.0:
        # Degenerate case: everything dropped (avoids uint32 overflow / inf scale).
        o_ref[...] = jnp.zeros_like(o_ref)
        return

    # Inverted dropout: keep with prob (1 - p), scale survivors by 1/(1 - p).
    threshold = jnp.uint32(min(int(p_drop * float(2**32)), 2**32 - 1))  # hoisted const
    inv_keep = 1.0 / (1.0 - p_drop)                                     # hoisted const
    keep = bits_ref[...] >= threshold
    y = jnp.where(keep, y * inv_keep, 0.0)

    o_ref[...] = y.astype(o_ref.dtype)


# ------------------------------ wrapper --------------------------------------


def _choose_tile_t(B, T, D, itemsize, budget_bytes=1 << 20):
    """Largest sequence tile such that one (B, tile_t, D) block is <= budget."""
    tile_t = max(8, budget_bytes // max(1, B * D * itemsize))
    tile_t = min(tile_t, T)
    if tile_t < T:
        tile_t = max(8, (tile_t // 8) * 8)   # sublane-aligned unless it spans full T
    return tile_t


def positional_embedding_forward(
    x, pe, *, d_model, p_drop=0.25, training=False, rng_key=None
):
    """x: (B, T, D), pe: (1, max_len, D).  Returns (B, T, D) in x.dtype."""
    B, T, D = x.shape
    assert D == d_model
    xscale = math.sqrt(d_model)
    pe_t = pe[:, :T, :].astype(x.dtype)          # glue: static slice of the table

    itemsize = jnp.dtype(x.dtype).itemsize
    tile_t = _choose_tile_t(B, T, D, itemsize)
    grid = (pl.cdiv(T, tile_t),)

    x_spec = pl.BlockSpec((B, tile_t, D), lambda t: (0, t, 0))
    pe_spec = pl.BlockSpec((1, tile_t, D), lambda t: (0, t, 0))
    out_spec = pl.BlockSpec((B, tile_t, D), lambda t: (0, t, 0))

    cp = pltpu.CompilerParams(
        dimension_semantics=("parallel",),       # T-tiles are independent (megacore)
        vmem_limit_bytes=32 * 1024 * 1024,       # safe on v5e/v6e/v7x; blocks are ~1 MiB
    )

    if training and p_drop > 0.0:
        if rng_key is None:
            rng_key = jax.random.PRNGKey(0)
        bits = jax.random.bits(rng_key, (B, T, D), dtype=jnp.uint32)
        bits_spec = pl.BlockSpec((B, tile_t, D), lambda t: (0, t, 0))
        kernel = functools.partial(_posemb_train_kernel, xscale=xscale, p_drop=p_drop)
        return pl.pallas_call(
            kernel,
            out_shape=jax.ShapeDtypeStruct((B, T, D), x.dtype),
            grid=grid,
            in_specs=[x_spec, pe_spec, bits_spec],
            out_specs=out_spec,
            compiler_params=cp,
        )(x, pe_t, bits)

    kernel = functools.partial(_posemb_eval_kernel, xscale=xscale)
    return pl.pallas_call(
        kernel,
        out_shape=jax.ShapeDtypeStruct((B, T, D), x.dtype),
        grid=grid,
        in_specs=[x_spec, pe_spec],
        out_specs=out_spec,
        compiler_params=cp,
    )(x, pe_t)


# ------------------------------- demo ----------------------------------------

if __name__ == "__main__":
    B, T, D = 2, 16, 128          # D chosen lane-dense (multiple of 128)
    MAX_LEN = 64

    key = jax.random.PRNGKey(0)
    kx, kd = jax.random.split(key)
    x = jax.random.normal(kx, (B, T, D), dtype=jnp.float32)
    pe = _make_pe(MAX_LEN, D, dtype=jnp.float32)

    # eval-mode forward (dropout is identity) vs pure-JAX reference
    out = positional_embedding_forward(x, pe, d_model=D, training=False)
    out = jax.block_until_ready(out)

    ref = x * math.sqrt(D) + pe[:, :T, :]
    assert out.shape == (B, T, D) and out.dtype == x.dtype
    assert jnp.allclose(out, ref, atol=1e-5, rtol=1e-5)

    # training path: every surviving element equals ref / (1 - p); the rest are 0.
    p = 0.25
    out_train = positional_embedding_forward(
        x, pe, d_model=D, p_drop=p, training=True, rng_key=kd
    )
    out_train = jax.block_until_ready(out_train)
    assert out_train.shape == (B, T, D)
    kept = out_train != 0.0
    assert jnp.allclose(
        jnp.where(kept, out_train, 0.0),
        jnp.where(kept, ref / (1.0 - p), 0.0),
        atol=1e-4,
        rtol=1e-4,
    )

    print("KERNEL_OK")
</pallas_src>

<mosaic_0001>
module attributes {stable_mosaic.version = 11 : i64} {
  func.func @_posemb_eval_kernel(%arg0: i32, %arg1: memref<2x16x128xf32, #tpu.memory_space<vmem>>, %arg2: memref<1x16x128xf32, #tpu.memory_space<vmem>>, %arg3: memref<2x16x128xf32, #tpu.memory_space<vmem>>) attributes {dimension_semantics = [#tpu.dimension_semantics<parallel>], iteration_bounds = array<i64: 1>, scalar_prefetch = 0 : i64, scratch_operands = 0 : i64, tpu.core_type = #tpu.core_type<tc>, window_params = [{transform_indices = @transform_0, window_bounds = array<i64: 2, 16, 128>}, {transform_indices = @transform_1, window_bounds = array<i64: 1, 16, 128>}, {transform_indices = @transform_2, window_bounds = array<i64: 2, 16, 128>}]} {
    %c0 = arith.constant 0 : index
    %c0_0 = arith.constant 0 : index
    %c0_1 = arith.constant 0 : index
    %0 = vector.load %arg1[%c0, %c0_0, %c0_1] : memref<2x16x128xf32, #tpu.memory_space<vmem>>, vector<2x16x128xf32>
    %cst = arith.constant 11.3137083 : f32
    %1 = vector.broadcast %cst : f32 to vector<2x16x128xf32>
    %2 = arith.mulf %0, %1 : vector<2x16x128xf32>
    %c0_2 = arith.constant 0 : index
    %c0_3 = arith.constant 0 : index
    %c0_4 = arith.constant 0 : index
    %3 = vector.load %arg2[%c0_2, %c0_3, %c0_4] : memref<1x16x128xf32, #tpu.memory_space<vmem>>, vector<1x16x128xf32>
    %4 = vector.broadcast %3 : vector<1x16x128xf32> to vector<2x16x128xf32>
    %5 = arith.addf %2, %4 : vector<2x16x128xf32>
    %c0_5 = arith.constant 0 : index
    %c0_6 = arith.constant 0 : index
    %c0_7 = arith.constant 0 : index
    %6 = vector.load %arg3[%c0_5, %c0_6, %c0_7] : memref<2x16x128xf32, #tpu.memory_space<vmem>>, vector<2x16x128xf32>
    tpu.vector_store %arg3[%c0_5, %c0_6, %c0_7], %5 {strides = array<i32>} : memref<2x16x128xf32, #tpu.memory_space<vmem>>, vector<2x16x128xf32>,
    return
  }
  func.func @transform_0(%arg0: i32) -> (i32, i32, i32) {
    %c0_i32 = arith.constant 0 : i32
    %c0_i32_0 = arith.constant 0 : i32
    %c0_i32_1 = arith.constant 0 : i32
    return %c0_i32, %arg0, %c0_i32_0 : i32, i32, i32
  }
  func.func @transform_1(%arg0: i32) -> (i32, i32, i32) {
    %c0_i32 = arith.constant 0 : i32
    %c0_i32_0 = arith.constant 0 : i32
    %c0_i32_1 = arith.constant 0 : i32
    return %c0_i32, %arg0, %c0_i32_0 : i32, i32, i32
  }
  func.func @transform_2(%arg0: i32) -> (i32, i32, i32) {
    %c0_i32 = arith.constant 0 : i32
    %c0_i32_0 = arith.constant 0 : i32
    %c0_i32_1 = arith.constant 0 : i32
    return %c0_i32, %arg0, %c0_i32_0 : i32, i32, i32
  }
}

</mosaic_0001>

<llo_original>
// kernel: tpu_custom_call.1
$region0: #{tpu_custom_call.1}
  #allocation0 [shape = 'u32[]', space=smem, size = 0x4, offset = 0x4, fixed_abs, tag = 'smem constant byte address 0x4 - core index']
  #allocation1 [shape = 'u32[144,128]{1,0:T(1,128)}', space=vmem, size = 0x12000, scoped, tag = 'internal scratch']
  %s0 = inlined_call_operand.hbm [shape: f32[2,16,128], index: 0, kind: input, shape index: {}]
  %s1 = inlined_call_operand.hbm [shape: f32[1,16,128], index: 1, kind: input, shape index: {}]
  %s2 = inlined_call_operand.hbm [shape: f32[2,16,128], index: 2, kind: output, shape index: {}]
  %s3 = sld [smem:[#allocation0]]
  $region26: #{tpu_custom_call.1} parent=0
    _
  %s5 = ssub.s32 1, %s3
  %s6 = scalar_select 0, %s5, %s3
  $region1: #{tpu_custom_call.1} parent=0
    #allocation2 [shape = 'u8[16384]{0}', space=vmem, size = 0x4000, scoped, tag = 'input window, operand 0, single buffered']
    #allocation3 [shape = 's32[1]{0}', space=sflag, size = 0x4, scoped, tag = 'scoped memory for tpu_custom_call.1']
    #allocation4 [shape = 's32[1]{0}', space=sflag, size = 0x4, scoped, tag = 'scoped memory for tpu_custom_call.1']
    #allocation5 [shape = 'u8[8192]{0}', space=vmem, size = 0x2000, scoped, tag = 'input window, operand 1, single buffered']
    #allocation6 [shape = 's32[1]{0}', space=sflag, size = 0x4, scoped, tag = 'scoped memory for tpu_custom_call.1']
    #allocation7 [shape = 'u8[16384]{0}', space=vmem, size = 0x4000, scoped, tag = 'output window, operand 0, single buffered']
    %7 = vsyncpa [#allocation3], 0
    %8 = vsyncpa [#allocation6], 0
    %9 = vsyncpa [#allocation4], 0
    // Predicated region
    $region2: #{tpu_custom_call.1} parent=1 // pred_check
      _
    $region3: #{tpu_custom_call.1} parent=1 // pred_check_branch
      %11 = sbr.rel (0) target = $region5
    $region4: #{tpu_custom_call.1} parent=1 // pred_region
      %s13 = ssub.s32 512, 512
      %14 = vsyncadd [#allocation3], %s13
      %s15 = sshll.u32 [#allocation2], 4
      %s16 = int_to_ptr.vmem [resolvable:$true] %s15
      %21 = dma.hbm_to_vmem [thread:$0]  %s0, 512, %s16, [#allocation3], 128, 128, 8
    $region5: #{tpu_custom_call.1} parent=1 // pred_fallthru
      _
    // Predicated region
    $region6: #{tpu_custom_call.1} parent=1 // pred_check
      _
    $region7: #{tpu_custom_call.1} parent=1 // pred_check_branch
      %23 = sbr.rel (0) target = $region9
    $region8: #{tpu_custom_call.1} parent=1 // pred_region
      %s25 = ssub.s32 256, 256
      %26 = vsyncadd [#allocation6], %s25
      %s27 = sshll.u32 [#allocation5], 4
      %s28 = int_to_ptr.vmem [resolvable:$true] %s27
      %33 = dma.hbm_to_vmem [thread:$0]  %s1, 256, %s28, [#allocation6], 128, 128, 8
    $region9: #{tpu_custom_call.1} parent=1 // pred_fallthru
      _
    // Predicated region
    $region10: #{tpu_custom_call.1} parent=1 // pred_check
      _
    $region11: #{tpu_custom_call.1} parent=1 // pred_check_branch
      %35 = sbr.rel (0) target = $region13
    $region12: #{tpu_custom_call.1} parent=1 // pred_region
      %36 = dma.done [#allocation3], 512
    $region13: #{tpu_custom_call.1} parent=1 // pred_fallthru
      _
    // Predicated region
    $region14: #{tpu_custom_call.1} parent=1 // pred_check
      _
    $region15: #{tpu_custom_call.1} parent=1 // pred_check_branch
      %38 = sbr.rel (0) target = $region17
    $region16: #{tpu_custom_call.1} parent=1 // pred_region
      %39 = dma.done [#allocation6], 256
    $region17: #{tpu_custom_call.1} parent=1 // pred_fallthru
      _
    %v40 = vld [vmem:[#allocation2] sm:$0xff]
    %v41 = vld [vmem:[#allocation2 + $0x8] sm:$0xff]
    %v42 = vld [vmem:[#allocation2 + $0x10] sm:$0xff]
    %v43 = vld [vmem:[#allocation2 + $0x18] sm:$0xff]
    %v44 = vmul.f32 %v40, 11.313708
    %v45 = vmul.f32 %v41, 11.313708
    %v46 = vmul.f32 %v42, 11.313708
    %v47 = vmul.f32 %v43, 11.313708
    %v48 = vld [vmem:[#allocation5] sm:$0xff]
    %v49 = vld [vmem:[#allocation5 + $0x8] sm:$0xff]
    %v50 = vadd.f32 %v44, %v48
    %v51 = vadd.f32 %v45, %v49
    %v52 = vadd.f32 %v46, %v48
    %v53 = vadd.f32 %v47, %v49
    %54 = vst [vmem:[#allocation7] sm:$0xff] %v50
    %55 = vst [vmem:[#allocation7 + $0x8] sm:$0xff] %v51
    %56 = vst [vmem:[#allocation7 + $0x10] sm:$0xff] %v52
    %57 = vst [vmem:[#allocation7 + $0x18] sm:$0xff] %v53
    // Predicated region
    $region18: #{tpu_custom_call.1} parent=1 // pred_check
      _
    $region19: #{tpu_custom_call.1} parent=1 // pred_check_branch
      %59 = sbr.rel (0) target = $region21
    $region20: #{tpu_custom_call.1} parent=1 // pred_region
      %s61 = ssub.s32 512, 512
      %62 = vsyncadd [#allocation4], %s61
      %s63 = sshll.u32 [#allocation7], 4
      %s64 = int_to_ptr.vmem [resolvable:$true] %s63
      %69 = dma.vmem_to_hbm [thread:$0]  %s64, 512, %s2, [#allocation4], 128, 128, 8
    $region21: #{tpu_custom_call.1} parent=1 // pred_fallthru
      _
    // Predicated region
    $region22: #{tpu_custom_call.1} parent=1 // pred_check
      _
    $region23: #{tpu_custom_call.1} parent=1 // pred_check_branch
      %71 = sbr.rel (0) target = $region25
    $region24: #{tpu_custom_call.1} parent=1 // pred_region
      %72 = dma.done [#allocation4], 512
    $region25: #{tpu_custom_call.1} parent=1 // pred_fallthru
      _
    %73 = vsyncpa [#allocation3], 1
    %74 = vsyncpa [#allocation6], 1
    %75 = vsyncpa [#allocation4], 1

</llo_original>
